<compile_context>
chip_gen: v5e
topology: v5e:2x2
jax: 0.10.0
libtpu: 0.0.40
codegen_flags: <defaults>
</compile_context>

<pallas_src>
import jax
import jax.numpy as jnp
from jax import lax
from jax.experimental import pallas as pl
from jax.experimental.pallas import tpu as pltpu


def _round_up(x, m):
    return (x + m - 1) // m * m


# ----------------------------------------------------------------------------
# Hoisted input projection: gx[d] = sum_g x[g] @ W[d, g] + b[d]  (both dirs).
# For layer 0:  x = (1, N, E);      W = (2, 1, E, 4H)
# For layer >0: x = (2, N, H);      W = (2, 2, H, 4H)   (fwd/bwd halves of W_ih)
# ----------------------------------------------------------------------------
def _proj_kernel(x_ref, w_ref, b_ref, o_ref):
    G = x_ref.shape[0]
    for d in range(2):
        acc = jnp.dot(x_ref[0].astype(jnp.bfloat16), w_ref[d, 0],
                      preferred_element_type=jnp.float32)
        for g in range(1, G):
            acc = acc + jnp.dot(x_ref[g].astype(jnp.bfloat16), w_ref[d, g],
                                preferred_element_type=jnp.float32)
        o_ref[d] = acc + b_ref[d]


def proj_gates(x, w, b, *, block_rows=512):
    """x: (G, N, K) f32; w: (2, G, K, 4H) bf16; b: (2, 1, 4H) f32 -> (2, N, 4H) f32."""
    G, N, K = x.shape
    P = w.shape[-1]
    bn = block_rows if N % block_rows == 0 else N
    return pl.pallas_call(
        _proj_kernel,
        out_shape=jax.ShapeDtypeStruct((2, N, P), jnp.float32),
        grid=(N // bn,),
        in_specs=[
            pl.BlockSpec((G, bn, K), lambda i: (0, i, 0)),
            pl.BlockSpec((2, G, K, P), lambda i: (0, 0, 0, 0)),
            pl.BlockSpec((2, 1, P), lambda i: (0, 0, 0)),
        ],
        out_specs=pl.BlockSpec((2, bn, P), lambda i: (0, i, 0)),
        compiler_params=pltpu.CompilerParams(dimension_semantics=("parallel",)),
    )(x, w, b)


# ----------------------------------------------------------------------------
# Fused bidirectional LSTM recurrence. Grid axis 0 = direction (parallel ->
# splits across TensorCores on v7x); the time loop is an in-kernel fori_loop.
# Only the recurrent h @ W_hh matmul is done per step (input proj is hoisted).
# Packed-sequence semantics: state frozen and output zeroed on padded steps.
# ----------------------------------------------------------------------------
def _bilstm_kernel(gx_ref, m_ref, whh_ref, o_ref, h_sc, c_sc):
    d = pl.program_id(0)                 # 0 = forward, 1 = backward
    T = gx_ref.shape[0]
    H = h_sc.shape[-1]

    h_sc[...] = jnp.zeros_like(h_sc)
    c_sc[...] = jnp.zeros_like(c_sc)
    whh = whh_ref[...]                   # (H, 4H) bf16, resident in vregs

    def body(t, carry):
        idx = jnp.where(d == 0, t, T - 1 - t)
        gx_t = gx_ref[idx]               # (Bp, 4H) precomputed x@W_ih + b
        m = m_ref[idx]                   # (Bp, 1) float {0,1}
        h_prev = h_sc[...]
        c_prev = c_sc[...]

        gates = gx_t + jnp.dot(h_prev.astype(jnp.bfloat16), whh,
                               preferred_element_type=jnp.float32)   # (Bp, 4H)
        i_g = jax.nn.sigmoid(gates[:, 0 * H:1 * H])
        f_g = jax.nn.sigmoid(gates[:, 1 * H:2 * H])
        g_g = jnp.tanh(gates[:, 2 * H:3 * H])
        o_g = jax.nn.sigmoid(gates[:, 3 * H:4 * H])

        c_new = f_g * c_prev + i_g * g_g
        h_new = o_g * jnp.tanh(c_new)

        # freeze state on padded steps, emit zeros (pad_packed_sequence(pad=0))
        c_sc[...] = m * c_new + (1.0 - m) * c_prev
        h_sc[...] = m * h_new + (1.0 - m) * h_prev
        o_ref[idx] = (h_new * m).astype(o_ref.dtype)
        return carry

    lax.fori_loop(0, T, body, 0, unroll=T <= 32)


def bilstm_layer(gx, mask_tm, whh):
    """gx: (2, T, Bp, 4H) f32; mask_tm: (T, Bp, 1) f32; whh: (2, H, 4H) bf16
       -> (2, T, Bp, H) f32 (direction-stacked hidden states)."""
    _, T, Bp, P = gx.shape
    H = P // 4
    return pl.pallas_call(
        _bilstm_kernel,
        out_shape=jax.ShapeDtypeStruct((2, T, Bp, H), jnp.float32),
        grid=(2,),
        in_specs=[
            pl.BlockSpec((None, T, Bp, P), lambda d: (d, 0, 0, 0)),
            pl.BlockSpec((T, Bp, 1), lambda d: (0, 0, 0)),
            pl.BlockSpec((None, H, P), lambda d: (d, 0, 0)),
        ],
        out_specs=pl.BlockSpec((None, T, Bp, H), lambda d: (d, 0, 0, 0)),
        scratch_shapes=[
            pltpu.VMEM((Bp, H), jnp.float32),   # h state
            pltpu.VMEM((Bp, H), jnp.float32),   # c state
        ],
        compiler_params=pltpu.CompilerParams(dimension_semantics=("parallel",)),
    )(gx, mask_tm, whh)


# ----------------------------------------------------------------------------
# Output head: logits = hf @ W[:H] + hb @ W[H:] + b (classes padded to 128
# lanes with bias -1e30), argmax pred, masked CE sum & count accumulated
# across row tiles.
# ----------------------------------------------------------------------------
def _head_kernel(x_ref, w_ref, b_ref, y_ref, m_ref, pred_ref, lsum_ref, cnt_ref):
    i = pl.program_id(0)

    @pl.when(i == 0)
    def _():
        lsum_ref[...] = jnp.zeros_like(lsum_ref)
        cnt_ref[...] = jnp.zeros_like(cnt_ref)

    logits = (jnp.dot(x_ref[0].astype(jnp.bfloat16), w_ref[0],
                      preferred_element_type=jnp.float32)
              + jnp.dot(x_ref[1].astype(jnp.bfloat16), w_ref[1],
                        preferred_element_type=jnp.float32)
              + b_ref[...])                                   # (bn, Cp)
    Cp = logits.shape[-1]

    mx = jnp.max(logits, axis=-1, keepdims=True)              # (bn, 1)
    col = lax.broadcasted_iota(jnp.int32, logits.shape, 1)

    # argmax over classes (first maximal index); padded classes sit at -1e30
    is_max = logits == mx
    pred = jnp.min(jnp.where(is_max, col, Cp), axis=-1, keepdims=True)
    pred_ref[...] = pred.astype(jnp.int32)

    # masked cross-entropy pieces (mean = sum / count done by the caller)
    lse = mx + jnp.log(jnp.sum(jnp.exp(logits - mx), axis=-1, keepdims=True))
    tgt = jnp.sum(jnp.where(col == y_ref[...], logits, 0.0), axis=-1, keepdims=True)
    nll = (lse - tgt) * m_ref[...]                            # (bn, 1)
    lsum_ref[...] += jnp.sum(nll, keepdims=True)              # (1, 1)
    cnt_ref[...] += jnp.sum(m_ref[...], keepdims=True)        # (1, 1)


def head_forward(x2, w2, b_pad, y_col, m_col, *, block_rows=512):
    """x2: (2, N, H); w2: (2, H, Cp) bf16; b_pad: (1, Cp); y/m: (N, 1)."""
    _, N, H = x2.shape
    Cp = w2.shape[-1]
    bn = block_rows if N % block_rows == 0 else N
    return pl.pallas_call(
        _head_kernel,
        out_shape=(
            jax.ShapeDtypeStruct((N, 1), jnp.int32),
            jax.ShapeDtypeStruct((1, 1), jnp.float32),
            jax.ShapeDtypeStruct((1, 1), jnp.float32),
        ),
        grid=(N // bn,),
        in_specs=[
            pl.BlockSpec((2, bn, H), lambda i: (0, i, 0)),
            pl.BlockSpec((2, H, Cp), lambda i: (0, 0, 0)),
            pl.BlockSpec((1, Cp), lambda i: (0, 0)),
            pl.BlockSpec((bn, 1), lambda i: (i, 0)),
            pl.BlockSpec((bn, 1), lambda i: (i, 0)),
        ],
        out_specs=(
            pl.BlockSpec((bn, 1), lambda i: (i, 0)),
            pl.BlockSpec((1, 1), lambda i: (0, 0)),
            pl.BlockSpec((1, 1), lambda i: (0, 0)),
        ),
        compiler_params=pltpu.CompilerParams(dimension_semantics=("arbitrary",)),
    )(x2, w2, b_pad, y_col, m_col)


# ----------------------------------------------------------------------------
# Parameter construction (deterministic, synthetic) and full forward pass.
# ----------------------------------------------------------------------------
def init_params(key, vocab_size, emb_dim, hidden, num_layers, n_class_per_task):
    params = {}
    key, k_emb = jax.random.split(key)
    params["embed"] = jax.random.normal(k_emb, (vocab_size, emb_dim),
                                        jnp.float32) * 0.1

    layers = []
    d_in = emb_dim
    for _ in range(num_layers):
        layer = {}
        for direction in ("fwd", "bwd"):
            key, k1, k2, k3 = jax.random.split(key, 4)
            layer[direction] = {
                "w_ih": jax.random.normal(k1, (d_in, 4 * hidden), jnp.float32) * 0.1,
                "w_hh": jax.random.normal(k2, (hidden, 4 * hidden), jnp.float32) * 0.1,
                "b": jax.random.normal(k3, (1, 4 * hidden), jnp.float32) * 0.1,
            }
        layers.append(layer)
        d_in = 2 * hidden
    params["lstm"] = layers

    heads = []
    for c in n_class_per_task:
        key, kw = jax.random.split(key)
        heads.append({
            "w": jax.random.normal(kw, (2 * hidden, c), jnp.float32) * 0.1,
            "b": jnp.zeros((1, c), jnp.float32),
        })
    params["out"] = heads
    return params


def random_lstm_forward(params, task_id, x_ids, y, seq_len, hidden, num_layers):
    """Mirrors RandomLSTM.forward: returns {'pred': (B,T) int32, 'loss': scalar}."""
    tid = int(task_id[0])                                # static task selection
    B, T = x_ids.shape
    H = hidden
    Bp = _round_up(max(B, 8), 8)                         # 8-sublane grain
    N = T * Bp

    # embedding lookup (glue gather stays in plain JAX)
    emb = jnp.take(params["embed"], x_ids, axis=0).astype(jnp.float32)   # (B,T,E)
    E = emb.shape[-1]

    # pad batch, build sequence mask (padded rows have seq_len 0 -> fully masked)
    emb_p = jnp.zeros((Bp, T, E), jnp.float32).at[:B].set(emb)
    seq_len_p = jnp.zeros((Bp,), jnp.int32).at[:B].set(seq_len.astype(jnp.int32))
    mask_bt = jnp.arange(T)[None, :] < seq_len_p[:, None]                # (Bp, T)
    mask_tm = jnp.transpose(mask_bt).astype(jnp.float32)[:, :, None]     # (T, Bp, 1)

    # time-major, rows ordered (t, b); first layer input is a single chunk
    x_stk = jnp.transpose(emb_p, (1, 0, 2)).reshape(1, N, E)             # (1, N, E)

    for layer in params["lstm"]:
        G, K = x_stk.shape[0], x_stk.shape[2]
        w_proj = jnp.stack([layer["fwd"]["w_ih"], layer["bwd"]["w_ih"]], axis=0)
        w_proj = w_proj.reshape(2, G, K, 4 * H).astype(jnp.bfloat16)     # (2,G,K,4H)
        b_proj = jnp.stack([layer["fwd"]["b"], layer["bwd"]["b"]], axis=0)
        whh = jnp.stack([layer["fwd"]["w_hh"], layer["bwd"]["w_hh"]],
                        axis=0).astype(jnp.bfloat16)                     # (2,H,4H)

        gx = proj_gates(x_stk, w_proj, b_proj)           # (2, N, 4H) hoisted proj
        gx = gx.reshape(2, T, Bp, 4 * H)
        out = bilstm_layer(gx, mask_tm, whh)             # (2, T, Bp, H)
        x_stk = out.reshape(2, N, H)                     # no concat needed

    # per-task head: classes padded to 128 lanes (pad bias -1e30)
    head = params["out"][tid]
    C = head["w"].shape[1]
    Cp = _round_up(C, 128)
    w2 = jnp.zeros((2 * H, Cp), jnp.float32).at[:, :C].set(head["w"])
    w2 = w2.reshape(2, H, Cp).astype(jnp.bfloat16)
    b_pad = jnp.full((1, Cp), -1e30, jnp.float32).at[:, :C].set(head["b"])

    y_p = jnp.zeros((Bp, T), jnp.int32).at[:B].set(y.astype(jnp.int32))
    y_col = jnp.transpose(y_p).reshape(N, 1)             # time-major rows
    m_col = mask_tm.reshape(N, 1)

    pred2, lsum, cnt = head_forward(x_stk, w2, b_pad, y_col, m_col)

    loss = lsum[0, 0] / jnp.maximum(cnt[0, 0], 1.0)      # guard cnt == 0
    pred = pred2[:, 0].reshape(T, Bp)[:, :B].transpose(1, 0)   # (B, T)
    return {"pred": pred, "loss": loss}


if __name__ == "__main__":
    # small shapes consistent with the module
    VOCAB = 100
    EMB = 50
    HIDDEN = 32
    NUM_LAYERS = 2
    N_CLASS_PER_TASK = (5, 7)
    B, T = 2, 8

    key = jax.random.PRNGKey(0)
    key, kp, kx, ky = jax.random.split(key, 4)

    params = init_params(kp, VOCAB, EMB, HIDDEN, NUM_LAYERS, N_CLASS_PER_TASK)

    task_id = jnp.array([0], dtype=jnp.int32)
    x_ids = jax.random.randint(kx, (B, T), 0, VOCAB, dtype=jnp.int32)
    y = jax.random.randint(ky, (B, T), 0, N_CLASS_PER_TASK[0], dtype=jnp.int32)
    seq_len = jnp.array([T, 5], dtype=jnp.int32)

    result = random_lstm_forward(params, task_id, x_ids, y, seq_len,
                                 HIDDEN, NUM_LAYERS)
    jax.block_until_ready(result)

    assert result["pred"].shape == (B, T)
    assert result["pred"].dtype == jnp.int32
    assert bool(jnp.isfinite(result["loss"]))
    print("KERNEL_OK")
</pallas_src>

<mosaic_0001>
module attributes {stable_mosaic.version = 11 : i64} {
  func.func @_proj_kernel(%arg0: i32, %arg1: memref<1x64x50xf32, #tpu.memory_space<vmem>>, %arg2: memref<2x1x50x128xbf16, #tpu.memory_space<vmem>>, %arg3: memref<2x1x128xf32, #tpu.memory_space<vmem>>, %arg4: memref<2x64x128xf32, #tpu.memory_space<vmem>>) attributes {dimension_semantics = [#tpu.dimension_semantics<parallel>], iteration_bounds = array<i64: 1>, scalar_prefetch = 0 : i64, scratch_operands = 0 : i64, tpu.core_type = #tpu.core_type<tc>, window_params = [{transform_indices = @transform_0, window_bounds = array<i64: 1, 64, 50>}, {pipeline_mode = #tpu.pipeline_mode<synchronous>, transform_indices = @transform_1, window_bounds = array<i64: 2, 1, 50, 128>}, {pipeline_mode = #tpu.pipeline_mode<synchronous>, transform_indices = @transform_2, window_bounds = array<i64: 2, 1, 128>}, {transform_indices = @transform_3, window_bounds = array<i64: 2, 64, 128>}]} {
    %c0 = arith.constant 0 : index
    %c0_0 = arith.constant 0 : index
    %c0_1 = arith.constant 0 : index
    %0 = vector.load %arg1[%c0, %c0_0, %c0_1] : memref<1x64x50xf32, #tpu.memory_space<vmem>>, vector<1x64x50xf32>
    %1 = vector.shape_cast %0 : vector<1x64x50xf32> to vector<64x50xf32>
    %2 = arith.truncf %1 : vector<64x50xf32> to vector<64x50xbf16>
    %c0_2 = arith.constant 0 : index
    %c0_3 = arith.constant 0 : index
    %c0_4 = arith.constant 0 : index
    %c0_5 = arith.constant 0 : index
    %3 = vector.load %arg2[%c0_2, %c0_3, %c0_4, %c0_5] : memref<2x1x50x128xbf16, #tpu.memory_space<vmem>>, vector<1x1x50x128xbf16>
    %4 = vector.shape_cast %3 : vector<1x1x50x128xbf16> to vector<50x128xbf16>
    %cst = arith.constant dense<0.000000e+00> : vector<64x128xf32>
    %5 = tpu.matmul %2, %4, %cst {dimension_numbers = #tpu.dot_dimension_numbers<[1], [0], [0], [1], [0, 0, 1, 1], [], []>} : vector<64x50xbf16>, vector<50x128xbf16>, vector<64x128xf32> -> vector<64x128xf32>
    %c0_6 = arith.constant 0 : index
    %c0_7 = arith.constant 0 : index
    %c0_8 = arith.constant 0 : index
    %6 = vector.load %arg3[%c0_6, %c0_7, %c0_8] : memref<2x1x128xf32, #tpu.memory_space<vmem>>, vector<1x1x128xf32>
    %7 = vector.shape_cast %6 : vector<1x1x128xf32> to vector<1x128xf32>
    %8 = vector.broadcast %7 : vector<1x128xf32> to vector<64x128xf32>
    %9 = arith.addf %5, %8 : vector<64x128xf32>
    %c0_9 = arith.constant 0 : index
    %c0_10 = arith.constant 0 : index
    %c0_11 = arith.constant 0 : index
    %10 = vector.load %arg4[%c0_9, %c0_10, %c0_11] : memref<2x64x128xf32, #tpu.memory_space<vmem>>, vector<1x64x128xf32>
    %11 = vector.shape_cast %10 : vector<1x64x128xf32> to vector<64x128xf32>
    %12 = vector.shape_cast %9 : vector<64x128xf32> to vector<1x64x128xf32>
    tpu.vector_store %arg4[%c0_9, %c0_10, %c0_11], %12 {strides = array<i32>} : memref<2x64x128xf32, #tpu.memory_space<vmem>>, vector<1x64x128xf32>,
    %c0_12 = arith.constant 0 : index
    %c0_13 = arith.constant 0 : index
    %c0_14 = arith.constant 0 : index
    %13 = vector.load %arg1[%c0_12, %c0_13, %c0_14] : memref<1x64x50xf32, #tpu.memory_space<vmem>>, vector<1x64x50xf32>
    %14 = vector.shape_cast %13 : vector<1x64x50xf32> to vector<64x50xf32>
    %15 = arith.truncf %14 : vector<64x50xf32> to vector<64x50xbf16>
    %c1 = arith.constant 1 : index
    %c0_15 = arith.constant 0 : index
    %c0_16 = arith.constant 0 : index
    %c0_17 = arith.constant 0 : index
    %16 = vector.load %arg2[%c1, %c0_15, %c0_16, %c0_17] : memref<2x1x50x128xbf16, #tpu.memory_space<vmem>>, vector<1x1x50x128xbf16>
    %17 = vector.shape_cast %16 : vector<1x1x50x128xbf16> to vector<50x128xbf16>
    %cst_18 = arith.constant dense<0.000000e+00> : vector<64x128xf32>
    %18 = tpu.matmul %15, %17, %cst_18 {dimension_numbers = #tpu.dot_dimension_numbers<[1], [0], [0], [1], [0, 0, 1, 1], [], []>} : vector<64x50xbf16>, vector<50x128xbf16>, vector<64x128xf32> -> vector<64x128xf32>
    %c1_19 = arith.constant 1 : index
    %c0_20 = arith.constant 0 : index
    %c0_21 = arith.constant 0 : index
    %19 = vector.load %arg3[%c1_19, %c0_20, %c0_21] : memref<2x1x128xf32, #tpu.memory_space<vmem>>, vector<1x1x128xf32>
    %20 = vector.shape_cast %19 : vector<1x1x128xf32> to vector<1x128xf32>
    %21 = vector.broadcast %20 : vector<1x128xf32> to vector<64x128xf32>
    %22 = arith.addf %18, %21 : vector<64x128xf32>
    %c1_22 = arith.constant 1 : index
    %c0_23 = arith.constant 0 : index
    %c0_24 = arith.constant 0 : index
    %23 = vector.load %arg4[%c1_22, %c0_23, %c0_24] : memref<2x64x128xf32, #tpu.memory_space<vmem>>, vector<1x64x128xf32>
    %24 = vector.shape_cast %23 : vector<1x64x128xf32> to vector<64x128xf32>
    %25 = vector.shape_cast %22 : vector<64x128xf32> to vector<1x64x128xf32>
    tpu.vector_store %arg4[%c1_22, %c0_23, %c0_24], %25 {strides = array<i32>} : memref<2x64x128xf32, #tpu.memory_space<vmem>>, vector<1x64x128xf32>,
    return
  }
  func.func @transform_0(%arg0: i32) -> (i32, i32, i32) {
    %c0_i32 = arith.constant 0 : i32
    %c0_i32_0 = arith.constant 0 : i32
    %c0_i32_1 = arith.constant 0 : i32
    return %c0_i32, %arg0, %c0_i32_0 : i32, i32, i32
  }
  func.func @transform_1(%arg0: i32) -> (i32, i32, i32, i32) {
    %c0_i32 = arith.constant 0 : i32
    %c0_i32_0 = arith.constant 0 : i32
    %c0_i32_1 = arith.constant 0 : i32
    %c0_i32_2 = arith.constant 0 : i32
    %c0_i32_3 = arith.constant 0 : i32
    return %c0_i32, %c0_i32_0, %c0_i32_1, %c0_i32_2 : i32, i32, i32, i32
  }
  func.func @transform_2(%arg0: i32) -> (i32, i32, i32) {
    %c0_i32 = arith.constant 0 : i32
    %c0_i32_0 = arith.constant 0 : i32
    %c0_i32_1 = arith.constant 0 : i32
    %c0_i32_2 = arith.constant 0 : i32
    return %c0_i32, %c0_i32_0, %c0_i32_1 : i32, i32, i32
  }
  func.func @transform_3(%arg0: i32) -> (i32, i32, i32) {
    %c0_i32 = arith.constant 0 : i32
    %c0_i32_0 = arith.constant 0 : i32
    %c0_i32_1 = arith.constant 0 : i32
    return %c0_i32, %arg0, %c0_i32_0 : i32, i32, i32
  }
}

</mosaic_0001>

<llo_original>
// kernel: tpu_custom_call.1
$region0: #{tpu_custom_call.1}
  #allocation0 [shape = 'u32[]', space=smem, size = 0x4, offset = 0x4, fixed_abs, tag = 'smem constant byte address 0x4 - core index']
  #allocation1 [shape = 'u32[72,128]{1,0:T(1,128)}', space=vmem, size = 0x9000, scoped, tag = 'internal scratch']
  %s0 = inlined_call_operand.vmem [shape: f32[1,64,50], index: 0, kind: input, shape index: {}]
  %s1 = inlined_call_operand.vmem [shape: bf16[2,1,50,128], index: 1, kind: input, shape index: {}]
  %s2 = inlined_call_operand.vmem [shape: f32[2,1,128], index: 2, kind: input, shape index: {}]
  %s3 = inlined_call_operand.hbm [shape: f32[2,64,128], index: 3, kind: output, shape index: {}]
  %s4 = sld [smem:[#allocation0]]
  $region22: #{tpu_custom_call.1} parent=0
    _
  %s6 = ssub.s32 1, %s4
  %s7 = scalar_select 0, %s6, %s4
  $region1: #{tpu_custom_call.1} parent=0
    #allocation2 [shape = 'u8[65536]{0}', space=vmem, size = 0x10000, scoped, tag = 'output window, operand 0, single buffered']
    #allocation3 [shape = 's32[1]{0}', space=sflag, size = 0x4, scoped, tag = 'scoped memory for tpu_custom_call.1']
    %8 = vsyncpa [#allocation3], 0
    // Predicated region
    $region2: #{tpu_custom_call.1} parent=1 // pred_check
      _
    $region3: #{tpu_custom_call.1} parent=1 // pred_check_branch
      %10 = sbr.rel (0) target = $region5
    $region4: #{tpu_custom_call.1} parent=1 // pred_region
      _
    $region5: #{tpu_custom_call.1} parent=1 // pred_fallthru
      _
    // Predicated region
    $region6: #{tpu_custom_call.1} parent=1 // pred_check
      _
    $region7: #{tpu_custom_call.1} parent=1 // pred_check_branch
      %12 = sbr.rel (0) target = $region9
    $region8: #{tpu_custom_call.1} parent=1 // pred_region
      _
    $region9: #{tpu_custom_call.1} parent=1 // pred_fallthru
      _
    // Predicated region
    $region10: #{tpu_custom_call.1} parent=1 // pred_check
      _
    $region11: #{tpu_custom_call.1} parent=1 // pred_check_branch
      %14 = sbr.rel (0) target = $region13
    $region12: #{tpu_custom_call.1} parent=1 // pred_region
      _
    $region13: #{tpu_custom_call.1} parent=1 // pred_fallthru
      _
    %v16 = vld [vmem:[%s0] sm:$0xff]
    %v17 = vld [vmem:[%s0 + $0x8] sm:$0xff]
    %v18 = vld [vmem:[%s0 + $0x10] sm:$0xff]
    %v19 = vld [vmem:[%s0 + $0x18] sm:$0xff]
    %v20 = vld [vmem:[%s0 + $0x20] sm:$0xff]
    %v21 = vld [vmem:[%s0 + $0x28] sm:$0xff]
    %v22 = vld [vmem:[%s0 + $0x30] sm:$0xff]
    %v23 = vld [vmem:[%s0 + $0x38] sm:$0xff]
    %v24 = vpack.c.bf16 %v17, %v16
    %v25 = vpack.c.bf16 %v19, %v18
    %v26 = vpack.c.bf16 %v21, %v20
    %v27 = vpack.c.bf16 %v23, %v22
    %v28 = vld [vmem:[%s1] sm:$0xf]
    %v29 = vld [vmem:[%s1 + $0x4] sm:$0xf]
    %v30 = vld [vmem:[%s1 + $0x8] sm:$0xf]
    %v31 = vld [vmem:[%s1 + $0xc] sm:$0xf]
    %v32 = vld [vmem:[%s1 + $0x10] sm:$0xf]
    %v33 = vld [vmem:[%s1 + $0x14] sm:$0xf]
    %v34 = vld [vmem:[%s1 + $0x18] sm:$0x1]
    %v35 = vld [vmem:[%s2] sm:$0x1]
    %v37 = vperm.slane %v35, 0
    %v46 = vunpack.c.l.b16 %v28
    %v47 = vunpack.c.l.b16 %v29
    %v48 = vunpack.c.l.b16 %v30
    %v49 = vunpack.c.l.b16 %v31
    %v50 = vunpack.c.l.b16 %v32
    %v51 = vunpack.c.l.b16 %v33
    %v52 = vunpack.c.l.b16 %v34
    %v53 = vpack.c.b16 %v47, %v46
    %v54 = vpack.c.b16 %v49, %v48
    %v55 = vpack.c.b16 %v51, %v50
    %v56 = vpack.c.b16 %v52, %v52
    %vm60 = vcmask 408576
    %v62 = vsel %vm60, %v24, 0
    %v65 = vsel %vm60, %v25, 0
    %v68 = vsel %vm60, %v26, 0
    %v71 = vsel %vm60, %v27, 0
    %vm73 = vcmask 1040384
    %v75 = vsel %vm73, %v56, 0
    %77 = vmatpush.bf16.msra.mxu0 0
    %78 = vmatpush.bf16.msra.mxu0 0
    %79 = vmatpush.bf16.msra.mxu0 0
    %80 = vmatpush.bf16.msra.mxu0 0
    %81 = vmatpush.bf16.msra.mxu0 %v75
    %82 = vmatpush.bf16.msra.mxu0 %v55
    %83 = vmatpush.bf16.msra.mxu0 %v54
    %84 = vmatpush.bf16.msra.mxu0 %v53
    %85 = vmatmul.bf16.gmra.mxu0 %v62
    %v86 = vpop.f32.mrf.mxu0
    %v87 = vadd.f32 %v37, %v86
    %v88 = vpop.f32.mrf.mxu0
    %v89 = vadd.f32 %v37, %v88
    %90 = vmatmul.bf16.gmra.mxu0 %v65
    %v91 = vpop.f32.mrf.mxu0
    %v92 = vadd.f32 %v37, %v91
    %v93 = vpop.f32.mrf.mxu0
    %v94 = vadd.f32 %v37, %v93
    %95 = vmatmul.bf16.gmra.mxu0 %v68
    %v96 = vpop.f32.mrf.mxu0
    %v97 = vadd.f32 %v37, %v96
    %v98 = vpop.f32.mrf.mxu0
    %v99 = vadd.f32 %v37, %v98
    %100 = vmatmul.bf16.gmra.mxu0 %v71
    %v101 = vpop.f32.mrf.mxu0
    %v102 = vadd.f32 %v37, %v101
    %v103 = vpop.f32.mrf.mxu0
    %v104 = vadd.f32 %v37, %v103
    %105 = vdwg.mxu0
    %106 = vst [vmem:[#allocation2] sm:$0xff] %v87
    %107 = vst [vmem:[#allocation2 + $0x8] sm:$0xff] %v89
    %108 = vst [vmem:[#allocation2 + $0x10] sm:$0xff] %v92
    %109 = vst [vmem:[#allocation2 + $0x18] sm:$0xff] %v94
    %110 = vst [vmem:[#allocation2 + $0x20] sm:$0xff] %v97
    %111 = vst [vmem:[#allocation2 + $0x28] sm:$0xff] %v99
    %112 = vst [vmem:[#allocation2 + $0x30] sm:$0xff] %v102
    %113 = vst [vmem:[#allocation2 + $0x38] sm:$0xff] %v104
    %v114 = vld [vmem:[%s0] sm:$0xff]
    %v115 = vld [vmem:[%s0 + $0x8] sm:$0xff]
    %v116 = vld [vmem:[%s0 + $0x10] sm:$0xff]
    %v117 = vld [vmem:[%s0 + $0x18] sm:$0xff]
    %v118 = vld [vmem:[%s0 + $0x20] sm:$0xff]
    %v119 = vld [vmem:[%s0 + $0x28] sm:$0xff]
    %v120 = vld [vmem:[%s0 + $0x30] sm:$0xff]
    %v121 = vld [vmem:[%s0 + $0x38] sm:$0xff]
    %v122 = vpack.c.bf16 %v115, %v114
    %v123 = vpack.c.bf16 %v117, %v116
    %v124 = vpack.c.bf16 %v119, %v118
    %v125 = vpack.c.bf16 %v121, %v120
    %s126 = scalar_lea.vmem %s1, 28
    %v127 = vld [vmem:[%s126] sm:$0xf]
    %v128 = vld [vmem:[%s126 + $0x4] sm:$0xf]
    %v129 = vld [vmem:[%s126 + $0x8] sm:$0xf]
    %v130 = vld [vmem:[%s126 + $0xc] sm:$0xf]
    %v131 = vld [vmem:[%s126 + $0x10] sm:$0xf]
    %v132 = vld [vmem:[%s126 + $0x14] sm:$0xf]
    %v133 = vld [vmem:[%s126 + $0x18] sm:$0x1]
    %s134 = scalar_lea.vmem %s2, 1
    %v135 = vld [vmem:[%s134] sm:$0x1]
    %v137 = vperm.slane %v135, 0
    %v146 = vunpack.c.l.b16 %v127
    %v147 = vunpack.c.l.b16 %v128
    %v148 = vunpack.c.l.b16 %v129
    %v149 = vunpack.c.l.b16 %v130
    %v150 = vunpack.c.l.b16 %v131
    %v151 = vunpack.c.l.b16 %v132
    %v152 = vunpack.c.l.b16 %v133
    %v153 = vpack.c.b16 %v147, %v146
    %v154 = vpack.c.b16 %v149, %v148
    %v155 = vpack.c.b16 %v151, %v150
    %v156 = vpack.c.b16 %v152, %v152
    %v161 = vsel %vm60, %v122, 0
    %v164 = vsel %vm60, %v123, 0
    %v167 = vsel %vm60, %v124, 0
    %v170 = vsel %vm60, %v125, 0
    %v173 = vsel %vm73, %v156, 0
    %175 = vmatpush.bf16.msra.mxu0 0
    %176 = vmatpush.bf16.msra.mxu0 0
    %177 = vmatpush.bf16.msra.mxu0 0
    %178 = vmatpush.bf16.msra.mxu0 0
    %179 = vmatpush.bf16.msra.mxu0 %v173
    %180 = vmatpush.bf16.msra.mxu0 %v155
    %181 = vmatpush.bf16.msra.mxu0 %v154
    %182 = vmatpush.bf16.msra.mxu0 %v153
    %183 = vmatmul.bf16.gmra.mxu0 %v161
    %v184 = vpop.f32.mrf.mxu0
    %v185 = vadd.f32 %v137, %v184
    %v186 = vpop.f32.mrf.mxu0
    %v187 = vadd.f32 %v137, %v186
    %188 = vmatmul.bf16.gmra.mxu0 %v164
    %v189 = vpop.f32.mrf.mxu0
    %v190 = vadd.f32 %v137, %v189
    %v191 = vpop.f32.mrf.mxu0
    %v192 = vadd.f32 %v137, %v191
    %193 = vmatmul.bf16.gmra.mxu0 %v167
    %v194 = vpop.f32.mrf.mxu0
    %v195 = vadd.f32 %v137, %v194
    %v196 = vpop.f32.mrf.mxu0
    %v197 = vadd.f32 %v137, %v196
    %198 = vmatmul.bf16.gmra.mxu0 %v170
    %v199 = vpop.f32.mrf.mxu0
    %v200 = vadd.f32 %v137, %v199
    %v201 = vpop.f32.mrf.mxu0
    %v202 = vadd.f32 %v137, %v201
    %203 = vdwg.mxu0
    %s204 = scalar_lea.vmem [#allocation2], 64
    %205 = vst [vmem:[%s204] sm:$0xff] %v185
    %206 = vst [vmem:[%s204 + $0x8] sm:$0xff] %v187
    %207 = vst [vmem:[%s204 + $0x10] sm:$0xff] %v190
    %208 = vst [vmem:[%s204 + $0x18] sm:$0xff] %v192
    %209 = vst [vmem:[%s204 + $0x20] sm:$0xff] %v195
    %210 = vst [vmem:[%s204 + $0x28] sm:$0xff] %v197
    %211 = vst [vmem:[%s204 + $0x30] sm:$0xff] %v200
    %212 = vst [vmem:[%s204 + $0x38] sm:$0xff] %v202
    // Predicated region
    $region14: #{tpu_custom_call.1} parent=1 // pred_check
      _
    $region15: #{tpu_custom_call.1} parent=1 // pred_check_branch
      %214 = sbr.rel (0) target = $region17
    $region16: #{tpu_custom_call.1} parent=1 // pred_region
      %216 = vsyncadd [#allocation3], 0
      %s217 = sshll.u32 [#allocation2], 4
      %s218 = int_to_ptr.vmem [resolvable:$true] %s217
      %s219 = sshll.u32 %s3, 4
      %s220 = int_to_ptr.hbm [resolvable:$true] %s219
      %225 = dma.vmem_to_hbm [thread:$0]  %s218, 2048, %s220, [#allocation3], 128, 128, 8
    $region17: #{tpu_custom_call.1} parent=1 // pred_fallthru
      _
    // Predicated region
    $region18: #{tpu_custom_call.1} parent=1 // pred_check
      _
    $region19: #{tpu_custom_call.1} parent=1 // pred_check_branch
      %227 = sbr.rel (0) target = $region21
    $region20: #{tpu_custom_call.1} parent=1 // pred_region
      %229 = dma.done [#allocation3], 2048
    $region21: #{tpu_custom_call.1} parent=1 // pred_fallthru
      _
    %230 = vsyncpa [#allocation3], 1

</llo_original>
